<compile_context>
chip_gen: v7x
topology: tpu7x:2x2x1
jax: 0.10.0
libtpu: 0.0.40
codegen_flags: <defaults>
</compile_context>

<pallas_src>
import functools

import jax
import jax.numpy as jnp
from jax.experimental import pallas as pl
from jax.experimental.pallas import tpu as pltpu

LANE = 128


def _round_up(x, m):
    return (x + m - 1) // m * m


def _make_kernel(k1p, H, AP):
    """k1p: padded fused-K of layer 1; H: hidden size; AP: padded action lanes."""
    k2 = 2 * H

    def kernel(act_ref, w_ref, vec_ref, mean_ref, logp_ref):
        f32 = jnp.float32

        # ---- packed activations: [x1 | h2_0 | action_pad] ----
        x1 = act_ref[:, 0:k1p]                        # (B, k1p) = [obs | h1_0 | 0]
        h2_0 = act_ref[:, k1p:k1p + H]                # (B, H)
        a = act_ref[:, k1p + H:k1p + H + AP]          # (B, AP) action, zero-padded

        # ---- packed weight slab (upcast once; no-op when stored as f32) ----
        w1 = w_ref[0:k1p, :].astype(f32)              # (k1p, H)   [W1_ih ; W1_hh ; 0]
        w2 = w_ref[k1p:k1p + k2, :].astype(f32)       # (2H, H)    [W2_ih ; W2_hh]
        wm = w_ref[k1p + k2:k1p + k2 + H, :].astype(f32)  # (H, H) Wm zero-padded cols

        # ---- packed vectors (biases pre-summed, log-prob constants pre-computed) ----
        b1 = vec_ref[0:1, :]                          # (1, H)  b1_ih + b1_hh
        b2 = vec_ref[1:2, :]                          # (1, H)  b2_ih + b2_hh
        bm = vec_ref[2:3, :]                          # (1, H)  bm zero-padded
        inv2v = vec_ref[3:4, 0:AP]                    # (1, AP) 0.5*exp(-2*log_std), 0-pad
        cnst = vec_ref[4:5, 0:AP]                     # (1, AP) -log_std - 0.5*log(2*pi)

        # RNNCell 1 (tanh) + module ReLU — single fused MXU dot.
        h1 = jnp.maximum(
            jnp.tanh(jnp.dot(x1, w1, preferred_element_type=f32) + b1), 0.0)

        # RNNCell 2 (tanh) + ReLU — fuse [h1 | h2_0] into one dot.
        x2 = jnp.concatenate([h1, h2_0], axis=-1)     # (B, 2H)
        h2 = jnp.maximum(
            jnp.tanh(jnp.dot(x2, w2, preferred_element_type=f32) + b2), 0.0)

        # hidden2mean + tanh (output columns padded to AP lanes -> dense store).
        mean_full = jnp.tanh(jnp.dot(h2, wm, preferred_element_type=f32) + bm)
        mean = mean_full[:, 0:AP]                     # (B, AP)
        mean_ref[...] = mean

        # Normal log-prob: only a multiply-add (constants hoisted to the wrapper).
        d = a - mean
        logp_ref[...] = jnp.sum(-(d * d) * inv2v + cnst, axis=-1, keepdims=True)

    return kernel


def pack_control_params(params, input_dim, weight_dtype=jnp.float32):
    """Host-side one-time packing: fuse ih/hh weights, pre-sum biases, hoist
    log-prob constants, pad to lane multiples. Call once and reuse."""
    H = params["w1_hh"].shape[0]
    A = params["wm"].shape[1]
    AP = _round_up(A, LANE)
    k1p = _round_up(input_dim + H, LANE)
    assert H % LANE == 0 and AP <= H, "hidden size must be a lane multiple >= padded A"

    # Fused layer-1 weight (K zero-padded to k1p) stacked over layer-2 and Wm.
    w1 = jnp.zeros((k1p, H), jnp.float32)
    w1 = w1.at[:input_dim, :].set(params["w1_ih"])
    w1 = w1.at[input_dim:input_dim + H, :].set(params["w1_hh"])
    w2 = jnp.concatenate([params["w2_ih"], params["w2_hh"]], axis=0)       # (2H, H)
    wm = jnp.zeros((H, H), jnp.float32).at[:, :A].set(params["wm"])        # (H, H)
    wslab = jnp.concatenate([w1, w2, wm], axis=0).astype(weight_dtype)     # (k1p+3H, H)

    # Vector buffer: biases pre-summed + hoisted Normal log-prob constants.
    log_std = params["log_std"].reshape(1, A).astype(jnp.float32)
    b1 = (params["b1_ih"] + params["b1_hh"]).reshape(1, H)
    b2 = (params["b2_ih"] + params["b2_hh"]).reshape(1, H)
    bm = jnp.zeros((1, H), jnp.float32).at[:, :A].set(params["bm"].reshape(1, A))
    inv2v = jnp.zeros((1, H), jnp.float32).at[:, :A].set(0.5 * jnp.exp(-2.0 * log_std))
    cnst = jnp.zeros((1, H), jnp.float32).at[:, :A].set(
        -log_std - 0.5 * jnp.log(2.0 * jnp.pi))
    vec = jnp.concatenate(
        [b1, b2, bm, inv2v, cnst, jnp.zeros((3, H), jnp.float32)], axis=0
    ).astype(jnp.float32)                                                  # (8, H)

    return {
        "wslab": wslab,
        "vec": vec,
        "log_std": log_std,
        "dims": (int(input_dim), int(H), int(A), int(AP), int(k1p)),
    }


def control_module_forward(obs, h1_0, h2_0, action, packed):
    input_dim, H, A, AP, k1p = packed["dims"]
    B = obs.shape[0]

    # Pack activations into a single lane-aligned buffer: [obs | h1_0 | 0 | h2_0 | a_pad]
    x1 = jnp.zeros((B, k1p), jnp.float32)
    x1 = x1.at[:, :input_dim].set(obs).at[:, input_dim:input_dim + H].set(h1_0)
    a_pad = jnp.zeros((B, AP), jnp.float32).at[:, :A].set(action)
    act = jnp.concatenate([x1, h2_0, a_pad], axis=-1)        # (B, k1p + H + AP)

    kernel = _make_kernel(k1p, H, AP)

    def full_spec(shape):
        # Single grid point; each array is one full-extent block resident in VMEM.
        return pl.BlockSpec(shape, lambda i: tuple(0 for _ in shape))

    mean_p, logp = pl.pallas_call(
        kernel,
        grid=(1,),
        in_specs=[full_spec(act.shape),
                  full_spec(packed["wslab"].shape),
                  full_spec(packed["vec"].shape)],
        out_specs=[full_spec((B, AP)), full_spec((B, 1))],
        out_shape=(jax.ShapeDtypeStruct((B, AP), jnp.float32),   # mean (lane-dense)
                   jax.ShapeDtypeStruct((B, 1), jnp.float32)),   # logp_a (keepdims)
        compiler_params=pltpu.CompilerParams(
            dimension_semantics=("arbitrary",)),
    )(act, packed["wslab"], packed["vec"])

    mean = mean_p[:, :A]
    std = jnp.exp(packed["log_std"])[0]          # hoisted out of the kernel (plain XLA)
    return mean, std, logp[:, 0]


def reference_forward(obs, h1_0, h2_0, p, action):
    h1 = jnp.maximum(jnp.tanh(obs @ p["w1_ih"] + p["b1_ih"]
                              + h1_0 @ p["w1_hh"] + p["b1_hh"]), 0.0)
    h2 = jnp.maximum(jnp.tanh(h1 @ p["w2_ih"] + p["b2_ih"]
                              + h2_0 @ p["w2_hh"] + p["b2_hh"]), 0.0)
    mean = jnp.tanh(h2 @ p["wm"] + p["bm"])
    log_std = p["log_std"]
    std = jnp.exp(log_std)
    lp = (-((action - mean) ** 2) / (2.0 * std * std)
          - log_std - 0.5 * jnp.log(2.0 * jnp.pi))
    return mean, std[0], jnp.sum(lp, axis=-1)


if __name__ == "__main__":
    # Small shapes consistent with the module's defaults (hidden shrunk for speed).
    action_dim = 8
    state_dim = 72
    goal_dim = 32
    latent_dim = 256
    hidden_size = 256
    batch = 2
    input_dim = state_dim + goal_dim + latent_dim  # 360

    key = jax.random.PRNGKey(0)
    keys = jax.random.split(key, 16)

    def init(k, shape, scale=0.05):
        return (scale * jax.random.normal(k, shape)).astype(jnp.float32)

    params = {
        "w1_ih": init(keys[0], (input_dim, hidden_size)),
        "b1_ih": init(keys[1], (1, hidden_size)),
        "w1_hh": init(keys[2], (hidden_size, hidden_size)),
        "b1_hh": init(keys[3], (1, hidden_size)),
        "w2_ih": init(keys[4], (hidden_size, hidden_size)),
        "b2_ih": init(keys[5], (1, hidden_size)),
        "w2_hh": init(keys[6], (hidden_size, hidden_size)),
        "b2_hh": init(keys[7], (1, hidden_size)),
        "wm":    init(keys[8], (hidden_size, action_dim)),
        "bm":    init(keys[9], (1, action_dim)),
        "log_std": jnp.full((1, action_dim), -0.5, dtype=jnp.float32),
    }

    state = init(keys[10], (batch, state_dim), scale=1.0)
    goal = init(keys[11], (batch, goal_dim), scale=1.0)
    zp = init(keys[12], (batch, latent_dim), scale=1.0)
    action = init(keys[13], (batch, action_dim), scale=1.0)

    # _prepare_obs: concat + random initial hidden states (deterministic here).
    obs = jnp.concatenate([state, goal, zp], axis=-1)
    h1_0 = jax.random.normal(keys[14], (batch, hidden_size), dtype=jnp.float32)
    h2_0 = jax.random.normal(keys[15], (batch, hidden_size), dtype=jnp.float32)

    # ---- f32 weight storage: tight check against the unfused reference ----
    packed = pack_control_params(params, input_dim, weight_dtype=jnp.float32)
    mean, std, logp_a = control_module_forward(obs, h1_0, h2_0, action, packed)
    jax.block_until_ready((mean, std, logp_a))

    mean_r, std_r, logp_r = reference_forward(obs, h1_0, h2_0, params, action)
    assert jnp.allclose(mean, mean_r, atol=2e-5), "mean mismatch (f32)"
    assert jnp.allclose(std, std_r, atol=1e-6), "std mismatch (f32)"
    assert jnp.allclose(logp_a, logp_r, atol=2e-4), "logp mismatch (f32)"

    # ---- bf16 weight storage (halves HBM weight traffic; f32 accumulation) ----
    packed_bf16 = pack_control_params(params, input_dim, weight_dtype=jnp.bfloat16)
    mean_b, std_b, logp_b = control_module_forward(obs, h1_0, h2_0, action, packed_bf16)
    jax.block_until_ready((mean_b, std_b, logp_b))

    rounded = {k: (v.astype(jnp.bfloat16).astype(jnp.float32)
                   if k in ("w1_ih", "w1_hh", "w2_ih", "w2_hh", "wm") else v)
               for k, v in params.items()}
    mean_rb, std_rb, logp_rb = reference_forward(obs, h1_0, h2_0, rounded, action)
    assert jnp.allclose(mean_b, mean_rb, atol=1e-4), "mean mismatch (bf16 weights)"
    assert jnp.allclose(std_b, std_rb, atol=1e-6), "std mismatch (bf16 weights)"
    assert jnp.allclose(logp_b, logp_rb, atol=1e-3), "logp mismatch (bf16 weights)"

    print("KERNEL_OK")
</pallas_src>

<mosaic_0001>
module attributes {stable_mosaic.version = 11 : i64} {
  func.func @kernel(%arg0: i32, %arg1: memref<2x1024xf32, #tpu.memory_space<vmem>>, %arg2: memref<1408x256xf32, #tpu.memory_space<vmem>>, %arg3: memref<8x256xf32, #tpu.memory_space<vmem>>, %arg4: memref<2x128xf32, #tpu.memory_space<vmem>>, %arg5: memref<2x1xf32, #tpu.memory_space<vmem>>) attributes {dimension_semantics = [#tpu.dimension_semantics<arbitrary>], iteration_bounds = array<i64: 1>, scalar_prefetch = 0 : i64, scratch_operands = 0 : i64, tpu.core_type = #tpu.core_type<tc>, window_params = [{pipeline_mode = #tpu.pipeline_mode<synchronous>, transform_indices = @transform_0, window_bounds = array<i64: 2, 1024>}, {pipeline_mode = #tpu.pipeline_mode<synchronous>, transform_indices = @transform_1, window_bounds = array<i64: 1408, 256>}, {pipeline_mode = #tpu.pipeline_mode<synchronous>, transform_indices = @transform_2, window_bounds = array<i64: 8, 256>}, {pipeline_mode = #tpu.pipeline_mode<synchronous>, transform_indices = @transform_3, window_bounds = array<i64: 2, 128>}, {pipeline_mode = #tpu.pipeline_mode<synchronous>, transform_indices = @transform_4, window_bounds = array<i64: 2, 1>}]} {
    %c0 = arith.constant 0 : index
    %c0_0 = arith.constant 0 : index
    %0 = vector.load %arg1[%c0, %c0_0] : memref<2x1024xf32, #tpu.memory_space<vmem>>, vector<2x640xf32>
    %c0_1 = arith.constant 0 : index
    %c640 = arith.constant 640 : index
    %1 = vector.load %arg1[%c0_1, %c640] : memref<2x1024xf32, #tpu.memory_space<vmem>>, vector<2x256xf32>
    %c0_2 = arith.constant 0 : index
    %c896 = arith.constant 896 : index
    %2 = vector.load %arg1[%c0_2, %c896] : memref<2x1024xf32, #tpu.memory_space<vmem>>, vector<2x128xf32>
    %c0_3 = arith.constant 0 : index
    %c0_4 = arith.constant 0 : index
    %3 = vector.load %arg2[%c0_3, %c0_4] : memref<1408x256xf32, #tpu.memory_space<vmem>>, vector<640x256xf32>
    %c640_5 = arith.constant 640 : index
    %c0_6 = arith.constant 0 : index
    %4 = vector.load %arg2[%c640_5, %c0_6] : memref<1408x256xf32, #tpu.memory_space<vmem>>, vector<512x256xf32>
    %c1152 = arith.constant 1152 : index
    %c0_7 = arith.constant 0 : index
    %5 = vector.load %arg2[%c1152, %c0_7] : memref<1408x256xf32, #tpu.memory_space<vmem>>, vector<256x256xf32>
    %c0_8 = arith.constant 0 : index
    %c0_9 = arith.constant 0 : index
    %6 = vector.load %arg3[%c0_8, %c0_9] : memref<8x256xf32, #tpu.memory_space<vmem>>, vector<1x256xf32>
    %c1 = arith.constant 1 : index
    %c0_10 = arith.constant 0 : index
    %7 = vector.load %arg3[%c1, %c0_10] : memref<8x256xf32, #tpu.memory_space<vmem>>, vector<1x256xf32>
    %c2 = arith.constant 2 : index
    %c0_11 = arith.constant 0 : index
    %8 = vector.load %arg3[%c2, %c0_11] : memref<8x256xf32, #tpu.memory_space<vmem>>, vector<1x256xf32>
    %c3 = arith.constant 3 : index
    %c0_12 = arith.constant 0 : index
    %9 = vector.load %arg3[%c3, %c0_12] : memref<8x256xf32, #tpu.memory_space<vmem>>, vector<1x128xf32>
    %c4 = arith.constant 4 : index
    %c0_13 = arith.constant 0 : index
    %10 = vector.load %arg3[%c4, %c0_13] : memref<8x256xf32, #tpu.memory_space<vmem>>, vector<1x128xf32>
    %cst = arith.constant dense<0.000000e+00> : vector<2x256xf32>
    %11 = tpu.matmul %0, %3, %cst {dimension_numbers = #tpu.dot_dimension_numbers<[1], [0], [0], [1], [0, 0, 1, 1], [], []>} : vector<2x640xf32>, vector<640x256xf32>, vector<2x256xf32> -> vector<2x256xf32>
    %12 = vector.broadcast %6 : vector<1x256xf32> to vector<2x256xf32>
    %13 = arith.addf %11, %12 : vector<2x256xf32>
    %14 = math.tanh %13 : vector<2x256xf32>
    %cst_14 = arith.constant 0.000000e+00 : f32
    %15 = vector.broadcast %cst_14 : f32 to vector<2x256xf32>
    %16 = arith.maximumf %14, %15 : vector<2x256xf32>
    %17 = tpu.concatenate %16, %1 in 1 : vector<2x256xf32>, vector<2x256xf32> -> vector<2x512xf32>
    %cst_15 = arith.constant dense<0.000000e+00> : vector<2x256xf32>
    %18 = tpu.matmul %17, %4, %cst_15 {dimension_numbers = #tpu.dot_dimension_numbers<[1], [0], [0], [1], [0, 0, 1, 1], [], []>} : vector<2x512xf32>, vector<512x256xf32>, vector<2x256xf32> -> vector<2x256xf32>
    %19 = vector.broadcast %7 : vector<1x256xf32> to vector<2x256xf32>
    %20 = arith.addf %18, %19 : vector<2x256xf32>
    %21 = math.tanh %20 : vector<2x256xf32>
    %cst_16 = arith.constant 0.000000e+00 : f32
    %22 = vector.broadcast %cst_16 : f32 to vector<2x256xf32>
    %23 = arith.maximumf %21, %22 : vector<2x256xf32>
    %cst_17 = arith.constant dense<0.000000e+00> : vector<2x256xf32>
    %24 = tpu.matmul %23, %5, %cst_17 {dimension_numbers = #tpu.dot_dimension_numbers<[1], [0], [0], [1], [0, 0, 1, 1], [], []>} : vector<2x256xf32>, vector<256x256xf32>, vector<2x256xf32> -> vector<2x256xf32>
    %25 = vector.broadcast %8 : vector<1x256xf32> to vector<2x256xf32>
    %26 = arith.addf %24, %25 : vector<2x256xf32>
    %27 = math.tanh %26 : vector<2x256xf32>
    %28 = vector.extract_strided_slice %27 {offsets = [0, 0], sizes = [2, 128], strides = [1, 1]} : vector<2x256xf32> to vector<2x128xf32>
    %c0_18 = arith.constant 0 : index
    %c0_19 = arith.constant 0 : index
    %29 = vector.load %arg4[%c0_18, %c0_19] : memref<2x128xf32, #tpu.memory_space<vmem>>, vector<2x128xf32>
    tpu.vector_store %arg4[%c0_18, %c0_19], %28 {strides = array<i32>} : memref<2x128xf32, #tpu.memory_space<vmem>>, vector<2x128xf32>,
    %30 = arith.subf %2, %28 : vector<2x128xf32>
    %31 = arith.mulf %30, %30 : vector<2x128xf32>
    %cst_20 = arith.constant 0.000000e+00 : f32
    %32 = vector.broadcast %cst_20 : f32 to vector<2x128xf32>
    %33 = arith.subf %32, %31 : vector<2x128xf32>
    %34 = vector.broadcast %9 : vector<1x128xf32> to vector<2x128xf32>
    %35 = arith.mulf %33, %34 : vector<2x128xf32>
    %36 = vector.broadcast %10 : vector<1x128xf32> to vector<2x128xf32>
    %37 = arith.addf %35, %36 : vector<2x128xf32>
    %cst_21 = arith.constant dense<0.000000e+00> : vector<2xf32>
    %38 = vector.multi_reduction <add>, %37, %cst_21 [1] : vector<2x128xf32> to vector<2xf32>
    %39 = vector.shape_cast %38 : vector<2xf32> to vector<2x1xf32>
    %c0_22 = arith.constant 0 : index
    %c0_23 = arith.constant 0 : index
    %40 = vector.load %arg5[%c0_22, %c0_23] : memref<2x1xf32, #tpu.memory_space<vmem>>, vector<2x1xf32>
    tpu.vector_store %arg5[%c0_22, %c0_23], %39 {strides = array<i32>} : memref<2x1xf32, #tpu.memory_space<vmem>>, vector<2x1xf32>,
    return
  }
  func.func @transform_0(%arg0: i32) -> (i32, i32) {
    %c0_i32 = arith.constant 0 : i32
    %c0_i32_0 = arith.constant 0 : i32
    %c0_i32_1 = arith.constant 0 : i32
    return %c0_i32, %c0_i32_0 : i32, i32
  }
  func.func @transform_1(%arg0: i32) -> (i32, i32) {
    %c0_i32 = arith.constant 0 : i32
    %c0_i32_0 = arith.constant 0 : i32
    %c0_i32_1 = arith.constant 0 : i32
    return %c0_i32, %c0_i32_0 : i32, i32
  }
  func.func @transform_2(%arg0: i32) -> (i32, i32) {
    %c0_i32 = arith.constant 0 : i32
    %c0_i32_0 = arith.constant 0 : i32
    %c0_i32_1 = arith.constant 0 : i32
    return %c0_i32, %c0_i32_0 : i32, i32
  }
  func.func @transform_3(%arg0: i32) -> (i32, i32) {
    %c0_i32 = arith.constant 0 : i32
    %c0_i32_0 = arith.constant 0 : i32
    %c0_i32_1 = arith.constant 0 : i32
    return %c0_i32, %c0_i32_0 : i32, i32
  }
  func.func @transform_4(%arg0: i32) -> (i32, i32) {
    %c0_i32 = arith.constant 0 : i32
    %c0_i32_0 = arith.constant 0 : i32
    %c0_i32_1 = arith.constant 0 : i32
    return %c0_i32, %c0_i32_0 : i32, i32
  }
}

</mosaic_0001>

<llo_original>
// kernel: tpu_custom_call.1
$region0: #{tpu_custom_call.1}
  #allocation0 [shape = 'u32[]', space=smem, size = 0x4, offset = 0x4, fixed_abs, tag = 'smem constant byte address 0x4 - core index']
  #allocation1 [shape = 'u32[144,128]{1,0:T(1,128)}', space=vmem, size = 0x12000, scoped, tag = 'internal scratch']
  %s0 = inlined_call_operand.hbm [shape: f32[2,1024], index: 0, kind: input, shape index: {}]
  %s1 = inlined_call_operand.hbm [shape: f32[1408,256], index: 1, kind: input, shape index: {}]
  %s2 = inlined_call_operand.hbm [shape: f32[8,256], index: 2, kind: input, shape index: {}]
  %s3 = inlined_call_operand.hbm [shape: f32[2,128], index: 3, kind: output, shape index: {0}]
  %s4 = inlined_call_operand.vmem [shape: f32[2,1], index: 4, kind: output, shape index: {1}]
  %5 = xla_tuple %s3, %s4
  %s6 = sld [smem:[#allocation0]]
  $region42: #{tpu_custom_call.1} parent=0
    _
  %s8 = ssub.s32 1, %s6
  %s9 = scalar_select 0, %s8, %s6
  $region1: #{tpu_custom_call.1} parent=0
    #allocation2 [shape = 'u8[8192]{0}', space=vmem, size = 0x2000, scoped, tag = 'input window, operand 0, single buffered']
    #allocation3 [shape = 's32[1]{0}', space=sflag, size = 0x4, scoped, tag = 'scoped memory for tpu_custom_call.1']
    #allocation4 [shape = 's32[1]{0}', space=sflag, size = 0x4, scoped, tag = 'scoped memory for tpu_custom_call.1']
    #allocation5 [shape = 'u8[1441792]{0}', space=vmem, size = 0x160000, scoped, tag = 'input window, operand 1, single buffered']
    #allocation6 [shape = 's32[1]{0}', space=sflag, size = 0x4, scoped, tag = 'scoped memory for tpu_custom_call.1']
    #allocation7 [shape = 'u8[8192]{0}', space=vmem, size = 0x2000, scoped, tag = 'input window, operand 2, single buffered']
    #allocation8 [shape = 'u8[1024]{0}', space=vmem, size = 0x400, scoped, tag = 'output window, operand 0, single buffered']
    %10 = vsyncpa [#allocation3], 0
    %11 = vsyncpa [#allocation6], 0
    %12 = vsyncpa [#allocation4], 0
    // Predicated region
    $region2: #{tpu_custom_call.1} parent=1 // pred_check
      _
    $region3: #{tpu_custom_call.1} parent=1 // pred_check_branch
      %14 = sbr.rel (0) target = $region5
    $region4: #{tpu_custom_call.1} parent=1 // pred_region
      %s16 = ssub.s32 256, 256
      %17 = vsyncadd [#allocation3], %s16
      %s19 = sshll.u32 [#allocation2], 4
      %s20 = int_to_ptr.vmem [resolvable:$true] %s19
      %22 = dma.hbm_to_vmem [thread:$0]  %s0, 256, %s20, [#allocation3]
    $region5: #{tpu_custom_call.1} parent=1 // pred_fallthru
      _
    // Predicated region
    $region6: #{tpu_custom_call.1} parent=1 // pred_check
      _
    $region7: #{tpu_custom_call.1} parent=1 // pred_check_branch
      %24 = sbr.rel (0) target = $region9
    $region8: #{tpu_custom_call.1} parent=1 // pred_region
      %s26 = ssub.s32 45056, 45056
      %27 = vsyncadd [#allocation6], %s26
      %s28 = sshll.u32 [#allocation5], 4
      %s29 = int_to_ptr.vmem [resolvable:$true] %s28
      %34 = dma.hbm_to_vmem [thread:$0]  %s1, 45056, %s29, [#allocation6], 256, 256, 16
    $region9: #{tpu_custom_call.1} parent=1 // pred_fallthru
      _
    // Predicated region
    $region10: #{tpu_custom_call.1} parent=1 // pred_check
      _
    $region11: #{tpu_custom_call.1} parent=1 // pred_check_branch
      %36 = sbr.rel (0) target = $region13
    $region12: #{tpu_custom_call.1} parent=1 // pred_region
      %s38 = ssub.s32 256, 256
      %39 = vsyncadd [#allocation6], %s38
      %s41 = sshll.u32 [#allocation7], 4
      %s42 = int_to_ptr.vmem [resolvable:$true] %s41
      %44 = dma.hbm_to_vmem [thread:$0]  %s2, 256, %s42, [#allocation6]
    $region13: #{tpu_custom_call.1} parent=1 // pred_fallthru
      _
    // Predicated region
    $region14: #{tpu_custom_call.1} parent=1 // pred_check
      _
    $region15: #{tpu_custom_call.1} parent=1 // pred_check_branch
      %46 = sbr.rel (0) target = $region17
    $region16: #{tpu_custom_call.1} parent=1 // pred_region
      %47 = dma.done [#allocation3], 256
    $region17: #{tpu_custom_call.1} parent=1 // pred_fallthru
      _
    // Predicated region
    $region18: #{tpu_custom_call.1} parent=1 // pred_check
      _
    $region19: #{tpu_custom_call.1} parent=1 // pred_check_branch
      %49 = sbr.rel (0) target = $region21
    $region20: #{tpu_custom_call.1} parent=1 // pred_region
      %50 = dma.done [#allocation6], 45056
    $region21: #{tpu_custom_call.1} parent=1 // pred_fallthru
      _
    // Predicated region
    $region22: #{tpu_custom_call.1} parent=1 // pred_check
      _
    $region23: #{tpu_custom_call.1} parent=1 // pred_check_branch
      %52 = sbr.rel (0) target = $region25
    $region24: #{tpu_custom_call.1} parent=1 // pred_region
      %53 = dma.done [#allocation6], 256
    $region25: #{tpu_custom_call.1} parent=1 // pred_fallthru
      _
    %v54 = vld [vmem:[#allocation2] sm:$0xff]
    %v55 = vld [vmem:[#allocation2 + $0x8] sm:$0x3]
    %v56 = vld [vmem:[#allocation2 + $0xa] sm:$0xf]
    %v57 = vld [vmem:[#allocation2 + $0xe] sm:$0x3]
    %v58 = vld [vmem:[#allocation5] sm:$0xff]
    %v59 = vld [vmem:[#allocation5 + $0x8] sm:$0xff]
    %v60 = vld [vmem:[#allocation5 + $0x10] sm:$0xff]
    %v61 = vld [vmem:[#allocation5 + $0x18] sm:$0xff]
    %v62 = vld [vmem:[#allocation5 + $0x20] sm:$0xff]
    %v63 = vld [vmem:[#allocation5 + $0x28] sm:$0xff]
    %v64 = vld [vmem:[#allocation5 + $0x30] sm:$0xff]
    %v65 = vld [vmem:[#allocation5 + $0x38] sm:$0xff]
    %v66 = vld [vmem:[#allocation5 + $0x40] sm:$0xff]
    %v67 = vld [vmem:[#allocation5 + $0x48] sm:$0xff]
    %v68 = vld [vmem:[#allocation5 + $0x50] sm:$0xff]
    %v69 = vld [vmem:[#allocation5 + $0x58] sm:$0xff]
    %v70 = vld [vmem:[#allocation5 + $0x60] sm:$0xff]
    %v71 = vld [vmem:[#allocation5 + $0x68] sm:$0xff]
    %v72 = vld [vmem:[#allocation5 + $0x70] sm:$0xff]
    %v73 = vld [vmem:[#allocation5 + $0x78] sm:$0xff]
    %v74 = vld [vmem:[#allocation5 + $0x80] sm:$0xff]
    %v75 = vld [vmem:[#allocation5 + $0x88] sm:$0xff]
    %v76 = vld [vmem:[#allocation5 + $0x90] sm:$0xff]
    %v77 = vld [vmem:[#allocation5 + $0x98] sm:$0xff]
    %v78 = vld [vmem:[#allocation5 + $0xa0] sm:$0xff]
    %v79 = vld [vmem:[#allocation5 + $0xa8] sm:$0xff]
    %v80 = vld [vmem:[#allocation5 + $0xb0] sm:$0xff]
    %v81 = vld [vmem:[#allocation5 + $0xb8] sm:$0xff]
    %v82 = vld [vmem:[#allocation5 + $0xc0] sm:$0xff]
    %v83 = vld [vmem:[#allocation5 + $0xc8] sm:$0xff]
    %v84 = vld [vmem:[#allocation5 + $0xd0] sm:$0xff]
    %v85 = vld [vmem:[#allocation5 + $0xd8] sm:$0xff]
    %v86 = vld [vmem:[#allocation5 + $0xe0] sm:$0xff]
    %v87 = vld [vmem:[#allocation5 + $0xe8] sm:$0xff]
    %v88 = vld [vmem:[#allocation5 + $0xf0] sm:$0xff]
    %v89 = vld [vmem:[#allocation5 + $0xf8] sm:$0xff]
    %v90 = vld [vmem:[#allocation5 + $0x100] sm:$0xff]
    %v91 = vld [vmem:[#allocation5 + $0x108] sm:$0xff]
    %v92 = vld [vmem:[#allocation5 + $0x110] sm:$0xff]
    %v93 = vld [vmem:[#allocation5 + $0x118] sm:$0xff]
    %v94 = vld [vmem:[#allocation5 + $0x120] sm:$0xff]
    %v95 = vld [vmem:[#allocation5 + $0x128] sm:$0xff]
    %v96 = vld [vmem:[#allocation5 + $0x130] sm:$0xff]
    %v97 = vld [vmem:[#allocation5 + $0x138] sm:$0xff]
    %v98 = vld [vmem:[#allocation5 + $0x140] sm:$0xff]
    %v99 = vld [vmem:[#allocation5 + $0x148] sm:$0xff]
    %v100 = vld [vmem:[#allocation5 + $0x150] sm:$0xff]
    %v101 = vld [vmem:[#allocation5 + $0x158] sm:$0xff]
    %v102 = vld [vmem:[#allocation5 + $0x160] sm:$0xff]
    %v103 = vld [vmem:[#allocation5 + $0x168] sm:$0xff]
    %v104 = vld [vmem:[#allocation5 + $0x170] sm:$0xff]
    %v105 = vld [vmem:[#allocation5 + $0x178] sm:$0xff]
    %v106 = vld [vmem:[#allocation5 + $0x180] sm:$0xff]
    %v107 = vld [vmem:[#allocation5 + $0x188] sm:$0xff]
    %v108 = vld [vmem:[#allocation5 + $0x190] sm:$0xff]
    %v109 = vld [vmem:[#allocation5 + $0x198] sm:$0xff]
    %v110 = vld [vmem:[#allocation5 + $0x1a0] sm:$0xff]
    %v111 = vld [vmem:[#allocation5 + $0x1a8] sm:$0xff]
    %v112 = vld [vmem:[#allocation5 + $0x1b0] sm:$0xff]
    %v113 = vld [vmem:[#allocation5 + $0x1b8] sm:$0xff]
    %v114 = vld [vmem:[#allocation5 + $0x1c0] sm:$0xff]
    %v115 = vld [vmem:[#allocation5 + $0x1c8] sm:$0xff]
    %v116 = vld [vmem:[#allocation5 + $0x1d0] sm:$0xff]
    %v117 = vld [vmem:[#allocation5 + $0x1d8] sm:$0xff]
    %v118 = vld [vmem:[#allocation5 + $0x1e0] sm:$0xff]
    %v119 = vld [vmem:[#allocation5 + $0x1e8] sm:$0xff]
    %v120 = vld [vmem:[#allocation5 + $0x1f0] sm:$0xff]
    %v121 = vld [vmem:[#allocation5 + $0x1f8] sm:$0xff]
    %v122 = vld [vmem:[#allocation5 + $0x200] sm:$0xff]
    %v123 = vld [vmem:[#allocation5 + $0x208] sm:$0xff]
    %v124 = vld [vmem:[#allocation5 + $0x210] sm:$0xff]
    %v125 = vld [vmem:[#allocation5 + $0x218] sm:$0xff]
    %v126 = vld [vmem:[#allocation5 + $0x220] sm:$0xff]
    %v127 = vld [vmem:[#allocation5 + $0x228] sm:$0xff]
    %v128 = vld [vmem:[#allocation5 + $0x230] sm:$0xff]
    %v129 = vld [vmem:[#allocation5 + $0x238] sm:$0xff]
    %v130 = vld [vmem:[#allocation5 + $0x240] sm:$0xff]
    %v131 = vld [vmem:[#allocation5 + $0x248] sm:$0xff]
    %v132 = vld [vmem:[#allocation5 + $0x250] sm:$0xff]
    %v133 = vld [vmem:[#allocation5 + $0x258] sm:$0xff]
    %v134 = vld [vmem:[#allocation5 + $0x260] sm:$0xff]
    %v135 = vld [vmem:[#allocation5 + $0x268] sm:$0xff]
    %v136 = vld [vmem:[#allocation5 + $0x270] sm:$0xff]
    %v137 = vld [vmem:[#allocation5 + $0x278] sm:$0xff]
    %v138 = vld [vmem:[#allocation5 + $0x280] sm:$0xff]
    %v139 = vld [vmem:[#allocation5 + $0x288] sm:$0xff]
    %v140 = vld [vmem:[#allocation5 + $0x290] sm:$0xff]
    %v141 = vld [vmem:[#allocation5 + $0x298] sm:$0xff]
    %v142 = vld [vmem:[#allocation5 + $0x2a0] sm:$0xff]
    %v143 = vld [vmem:[#allocation5 + $0x2a8] sm:$0xff]
    %v144 = vld [vmem:[#allocation5 + $0x2b0] sm:$0xff]
    %v145 = vld [vmem:[#allocation5 + $0x2b8] sm:$0xff]
    %v146 = vld [vmem:[#allocation5 + $0x2c0] sm:$0xff]
    %v147 = vld [vmem:[#allocation5 + $0x2c8] sm:$0xff]
    %v148 = vld [vmem:[#allocation5 + $0x2d0] sm:$0xff]
    %v149 = vld [vmem:[#allocation5 + $0x2d8] sm:$0xff]
    %v150 = vld [vmem:[#allocation5 + $0x2e0] sm:$0xff]
    %v151 = vld [vmem:[#allocation5 + $0x2e8] sm:$0xff]
    %v152 = vld [vmem:[#allocation5 + $0x2f0] sm:$0xff]
    %v153 = vld [vmem:[#allocation5 + $0x2f8] sm:$0xff]
    %v154 = vld [vmem:[#allocation5 + $0x300] sm:$0xff]
    %v155 = vld [vmem:[#allocation5 + $0x308] sm:$0xff]
    %v156 = vld [vmem:[#allocation5 + $0x310] sm:$0xff]
    %v157 = vld [vmem:[#allocation5 + $0x318] sm:$0xff]
    %v158 = vld [vmem:[#allocation5 + $0x320] sm:$0xff]
    %v159 = vld [vmem:[#allocation5 + $0x328] sm:$0xff]
    %v160 = vld [vmem:[#allocation5 + $0x330] sm:$0xff]
    %v161 = vld [vmem:[#allocation5 + $0x338] sm:$0xff]
    %v162 = vld [vmem:[#allocation5 + $0x340] sm:$0xff]
    %v163 = vld [vmem:[#allocation5 + $0x348] sm:$0xff]
    %v164 = vld [vmem:[#allocation5 + $0x350] sm:$0xff]
    %v165 = vld [vmem:[#allocation5 + $0x358] sm:$0xff]
    %v166 = vld [vmem:[#allocation5 + $0x360] sm:$0xff]
    %v167 = vld [vmem:[#allocation5 + $0x368] sm:$0xff]
    %v168 = vld [vmem:[#allocation5 + $0x370] sm:$0xff]
    %v169 = vld [vmem:[#allocation5 + $0x378] sm:$0xff]
    %v170 = vld [vmem:[#allocation5 + $0x380] sm:$0xff]
    %v171 = vld [vmem:[#allocation5 + $0x388] sm:$0xff]
    %v172 = vld [vmem:[#allocation5 + $0x390] sm:$0xff]
    %v173 = vld [vmem:[#allocation5 + $0x398] sm:$0xff]
    %v174 = vld [vmem:[#allocation5 + $0x3a0] sm:$0xff]
    %v175 = vld [vmem:[#allocation5 + $0x3a8] sm:$0xff]
    %v176 = vld [vmem:[#allocation5 + $0x3b0] sm:$0xff]
    %v177 = vld [vmem:[#allocation5 + $0x3b8] sm:$0xff]
    %v178 = vld [vmem:[#allocation5 + $0x3c0] sm:$0xff]
    %v179 = vld [vmem:[#allocation5 + $0x3c8] sm:$0xff]
    %v180 = vld [vmem:[#allocation5 + $0x3d0] sm:$0xff]
    %v181 = vld [vmem:[#allocation5 + $0x3d8] sm:$0xff]
    %v182 = vld [vmem:[#allocation5 + $0x3e0] sm:$0xff]
    %v183 = vld [vmem:[#allocation5 + $0x3e8] sm:$0xff]
    %v184 = vld [vmem:[#allocation5 + $0x3f0] sm:$0xff]
    %v185 = vld [vmem:[#allocation5 + $0x3f8] sm:$0xff]
    %v186 = vld [vmem:[#allocation5 + $0x400] sm:$0xff]
    %v187 = vld [vmem:[#allocation5 + $0x408] sm:$0xff]
    %v188 = vld [vmem:[#allocation5 + $0x410] sm:$0xff]
    %v189 = vld [vmem:[#allocation5 + $0x418] sm:$0xff]
    %v190 = vld [vmem:[#allocation5 + $0x420] sm:$0xff]
    %v191 = vld [vmem:[#allocation5 + $0x428] sm:$0xff]
    %v192 = vld [vmem:[#allocation5 + $0x430] sm:$0xff]
    %v193 = vld [vmem:[#allocation5 + $0x438] sm:$0xff]
    %v194 = vld [vmem:[#allocation5 + $0x440] sm:$0xff]
    %v195 = vld [vmem:[#allocation5 + $0x448] sm:$0xff]
    %v196 = vld [vmem:[#allocation5 + $0x450] sm:$0xff]
    %v197 = vld [vmem:[#allocation5 + $0x458] sm:$0xff]
    %v198 = vld [vmem:[#allocation5 + $0x460] sm:$0xff]
    %v199 = vld [vmem:[#allocation5 + $0x468] sm:$0xff]
    %v200 = vld [vmem:[#allocation5 + $0x470] sm:$0xff]
    %v201 = vld [vmem:[#allocation5 + $0x478] sm:$0xff]
    %v202 = vld [vmem:[#allocation5 + $0x480] sm:$0xff]
    %v203 = vld [vmem:[#allocation5 + $0x488] sm:$0xff]
    %v204 = vld [vmem:[#allocation5 + $0x490] sm:$0xff]
    %v205 = vld [vmem:[#allocation5 + $0x498] sm:$0xff]
    %v206 = vld [vmem:[#allocation5 + $0x4a0] sm:$0xff]
    %v207 = vld [vmem:[#allocation5 + $0x4a8] sm:$0xff]
    %v208 = vld [vmem:[#allocation5 + $0x4b0] sm:$0xff]
    %v209 = vld [vmem:[#allocation5 + $0x4b8] sm:$0xff]
    %v210 = vld [vmem:[#allocation5 + $0x4c0] sm:$0xff]
    %v211 = vld [vmem:[#allocation5 + $0x4c8] sm:$0xff]
    %v212 = vld [vmem:[#allocation5 + $0x4d0] sm:$0xff]
    %v213 = vld [vmem:[#allocation5 + $0x4d8] sm:$0xff]
    %v214 = vld [vmem:[#allocation5 + $0x4e0] sm:$0xff]
    %v215 = vld [vmem:[#allocation5 + $0x4e8] sm:$0xff]
    %v216 = vld [vmem:[#allocation5 + $0x4f0] sm:$0xff]
    %v217 = vld [vmem:[#allocation5 + $0x4f8] sm:$0xff]
    %v218 = vld [vmem:[#allocation5 + $0x500] sm:$0xff]
    %v219 = vld [vmem:[#allocation5 + $0x508] sm:$0xff]
    %v220 = vld [vmem:[#allocation5 + $0x510] sm:$0xff]
    %v221 = vld [vmem:[#allocation5 + $0x518] sm:$0xff]
    %v222 = vld [vmem:[#allocation5 + $0x520] sm:$0xff]
    %v223 = vld [vmem:[#allocation5 + $0x528] sm:$0xff]
    %v224 = vld [vmem:[#allocation5 + $0x530] sm:$0xff]
    %v225 = vld [vmem:[#allocation5 + $0x538] sm:$0xff]
    %v226 = vld [vmem:[#allocation5 + $0x540] sm:$0xff]
    %v227 = vld [vmem:[#allocation5 + $0x548] sm:$0xff]
    %v228 = vld [vmem:[#allocation5 + $0x550] sm:$0xff]
    %v229 = vld [vmem:[#allocation5 + $0x558] sm:$0xff]
    %v230 = vld [vmem:[#allocation5 + $0x560] sm:$0xff]
    %v231 = vld [vmem:[#allocation5 + $0x568] sm:$0xff]
    %v232 = vld [vmem:[#allocation5 + $0x570] sm:$0xff]
    %v233 = vld [vmem:[#allocation5 + $0x578] sm:$0xff]
    %v234 = vld [vmem:[#allocation5 + $0x580] sm:$0xff]
    %v235 = vld [vmem:[#allocation5 + $0x588] sm:$0xff]
    %v236 = vld [vmem:[#allocation5 + $0x590] sm:$0xff]
    %v237 = vld [vmem:[#allocation5 + $0x598] sm:$0xff]
    %v238 = vld [vmem:[#allocation5 + $0x5a0] sm:$0xff]
    %v239 = vld [vmem:[#allocation5 + $0x5a8] sm:$0xff]
    %v240 = vld [vmem:[#allocation5 + $0x5b0] sm:$0xff]
    %v241 = vld [vmem:[#allocation5 + $0x5b8] sm:$0xff]
    %v242 = vld [vmem:[#allocation5 + $0x5c0] sm:$0xff]
    %v243 = vld [vmem:[#allocation5 + $0x5c8] sm:$0xff]
    %v244 = vld [vmem:[#allocation5 + $0x5d0] sm:$0xff]
    %v245 = vld [vmem:[#allocation5 + $0x5d8] sm:$0xff]
    %v246 = vld [vmem:[#allocation5 + $0x5e0] sm:$0xff]
    %v247 = vld [vmem:[#allocation5 + $0x5e8] sm:$0xff]
    %v248 = vld [vmem:[#allocation5 + $0x5f0] sm:$0xff]
    %v249 = vld [vmem:[#allocation5 + $0x5f8] sm:$0xff]
    %v250 = vld [vmem:[#allocation5 + $0x600] sm:$0xff]
    %v251 = vld [vmem:[#allocation5 + $0x608] sm:$0xff]
    %v252 = vld [vmem:[#allocation5 + $0x610] sm:$0xff]
    %v253 = vld [vmem:[#allocation5 + $0x618] sm:$0xff]
    %v254 = vld [vmem:[#allocation5 + $0x620] sm:$0xff]
    %v255 = vld [vmem:[#allocation5 + $0x628] sm:$0xff]
    %v256 = vld [vmem:[#allocation5 + $0x630] sm:$0xff]
    %v257 = vld [vmem:[#allocation5 + $0x638] sm:$0xff]
    %v258 = vld [vmem:[#allocation5 + $0x640] sm:$0xff]
    %v259 = vld [vmem:[#allocation5 + $0x648] sm:$0xff]
    %v260 = vld [vmem:[#allocation5 + $0x650] sm:$0xff]
    %v261 = vld [vmem:[#allocation5 + $0x658] sm:$0xff]
    %v262 = vld [vmem:[#allocation5 + $0x660] sm:$0xff]
    %v263 = vld [vmem:[#allocation5 + $0x668] sm:$0xff]
    %v264 = vld [vmem:[#allocation5 + $0x670] sm:$0xff]
    %v265 = vld [vmem:[#allocation5 + $0x678] sm:$0xff]
    %v266 = vld [vmem:[#allocation5 + $0x680] sm:$0xff]
    %v267 = vld [vmem:[#allocation5 + $0x688] sm:$0xff]
    %v268 = vld [vmem:[#allocation5 + $0x690] sm:$0xff]
    %v269 = vld [vmem:[#allocation5 + $0x698] sm:$0xff]
    %v270 = vld [vmem:[#allocation5 + $0x6a0] sm:$0xff]
    %v271 = vld [vmem:[#allocation5 + $0x6a8] sm:$0xff]
    %v272 = vld [vmem:[#allocation5 + $0x6b0] sm:$0xff]
    %v273 = vld [vmem:[#allocation5 + $0x6b8] sm:$0xff]
    %v274 = vld [vmem:[#allocation5 + $0x6c0] sm:$0xff]
    %v275 = vld [vmem:[#allocation5 + $0x6c8] sm:$0xff]
    %v276 = vld [vmem:[#allocation5 + $0x6d0] sm:$0xff]
    %v277 = vld [vmem:[#allocation5 + $0x6d8] sm:$0xff]
    %v278 = vld [vmem:[#allocation5 + $0x6e0] sm:$0xff]
    %v279 = vld [vmem:[#allocation5 + $0x6e8] sm:$0xff]
    %v280 = vld [vmem:[#allocation5 + $0x6f0] sm:$0xff]
    %v281 = vld [vmem:[#allocation5 + $0x6f8] sm:$0xff]
    %v282 = vld [vmem:[#allocation5 + $0x700] sm:$0xff]
    %v283 = vld [vmem:[#allocation5 + $0x708] sm:$0xff]
    %v284 = vld [vmem:[#allocation5 + $0x710] sm:$0xff]
    %v285 = vld [vmem:[#allocation5 + $0x718] sm:$0xff]
    %v286 = vld [vmem:[#allocation5 + $0x720] sm:$0xff]
    %v287 = vld [vmem:[#allocation5 + $0x728] sm:$0xff]
    %v288 = vld [vmem:[#allocation5 + $0x730] sm:$0xff]
    %v289 = vld [vmem:[#allocation5 + $0x738] sm:$0xff]
    %v290 = vld [vmem:[#allocation5 + $0x740] sm:$0xff]
    %v291 = vld [vmem:[#allocation5 + $0x748] sm:$0xff]
    %v292 = vld [vmem:[#allocation5 + $0x750] sm:$0xff]
    %v293 = vld [vmem:[#allocation5 + $0x758] sm:$0xff]
    %v294 = vld [vmem:[#allocation5 + $0x760] sm:$0xff]
    %v295 = vld [vmem:[#allocation5 + $0x768] sm:$0xff]
    %v296 = vld [vmem:[#allocation5 + $0x770] sm:$0xff]
    %v297 = vld [vmem:[#allocation5 + $0x778] sm:$0xff]
    %v298 = vld [vmem:[#allocation5 + $0x780] sm:$0xff]
    %v299 = vld [vmem:[#allocation5 + $0x788] sm:$0xff]
    %v300 = vld [vmem:[#allocation5 + $0x790] sm:$0xff]
    %v301 = vld [vmem:[#allocation5 + $0x798] sm:$0xff]
    %v302 = vld [vmem:[#allocation5 + $0x7a0] sm:$0xff]
    %v303 = vld [vmem:[#allocation5 + $0x7a8] sm:$0xff]
    %v304 = vld [vmem:[#allocation5 + $0x7b0] sm:$0xff]
    %v305 = vld [vmem:[#allocation5 + $0x7b8] sm:$0xff]
    %v306 = vld [vmem:[#allocation5 + $0x7c0] sm:$0xff]
    %v307 = vld [vmem:[#allocation5 + $0x7c8] sm:$0xff]
    %v308 = vld [vmem:[#allocation5 + $0x7d0] sm:$0xff]
    %v309 = vld [vmem:[#allocation5 + $0x7d8] sm:$0xff]
    %v310 = vld [vmem:[#allocation5 + $0x7e0] sm:$0xff]
    %v311 = vld [vmem:[#allocation5 + $0x7e8] sm:$0xff]
    %v312 = vld [vmem:[#allocation5 + $0x7f0] sm:$0xff]
    %v313 = vld [vmem:[#allocation5 + $0x7f8] sm:$0xff]
    %v314 = vld [vmem:[#allocation5 + $0x800] sm:$0xff]
    %v315 = vld [vmem:[#allocation5 + $0x808] sm:$0xff]
    %v316 = vld [vmem:[#allocation5 + $0x810] sm:$0xff]
    %v317 = vld [vmem:[#allocation5 + $0x818] sm:$0xff]
    %v318 = vld [vmem:[#allocation5 + $0x820] sm:$0xff]
    %v319 = vld [vmem:[#allocation5 + $0x828] sm:$0xff]
    %v320 = vld [vmem:[#allocation5 + $0x830] sm:$0xff]
    %v321 = vld [vmem:[#allocation5 + $0x838] sm:$0xff]
    %v322 = vld [vmem:[#allocation5 + $0x840] sm:$0xff]
    %v323 = vld [vmem:[#allocation5 + $0x848] sm:$0xff]
    %v324 = vld [vmem:[#allocation5 + $0x850] sm:$0xff]
    %v325 = vld [vmem:[#allocation5 + $0x858] sm:$0xff]
    %v326 = vld [vmem:[#allocation5 + $0x860] sm:$0xff]
    %v327 = vld [vmem:[#allocation5 + $0x868] sm:$0xff]
    %v328 = vld [vmem:[#allocation5 + $0x870] sm:$0xff]
    %v329 = vld [vmem:[#allocation5 + $0x878] sm:$0xff]
    %v330 = vld [vmem:[#allocation5 + $0x880] sm:$0xff]
    %v331 = vld [vmem:[#allocation5 + $0x888] sm:$0xff]
    %v332 = vld [vmem:[#allocation5 + $0x890] sm:$0xff]
    %v333 = vld [vmem:[#allocation5 + $0x898] sm:$0xff]
    %v334 = vld [vmem:[#allocation5 + $0x8a0] sm:$0xff]
    %v335 = vld [vmem:[#allocation5 + $0x8a8] sm:$0xff]
    %v336 = vld [vmem:[#allocation5 + $0x8b0] sm:$0xff]
    %v337 = vld [vmem:[#allocation5 + $0x8b8] sm:$0xff]
    %v338 = vld [vmem:[#allocation5 + $0x8c0] sm:$0xff]
    %v339 = vld [vmem:[#allocation5 + $0x8c8] sm:$0xff]
    %v340 = vld [vmem:[#allocation5 + $0x8d0] sm:$0xff]
    %v341 = vld [vmem:[#allocation5 + $0x8d8] sm:$0xff]
    %v342 = vld [vmem:[#allocation5 + $0x8e0] sm:$0xff]
    %v343 = vld [vmem:[#allocation5 + $0x8e8] sm:$0xff]
    %v344 = vld [vmem:[#allocation5 + $0x8f0] sm:$0xff]
    %v345 = vld [vmem:[#allocation5 + $0x8f8] sm:$0xff]
    %v346 = vld [vmem:[#allocation5 + $0x900] sm:$0xff]
    %v347 = vld [vmem:[#allocation5 + $0x908] sm:$0xff]
    %v348 = vld [vmem:[#allocation5 + $0x910] sm:$0xff]
    %v349 = vld [vmem:[#allocation5 + $0x918] sm:$0xff]
    %v350 = vld [vmem:[#allocation5 + $0x920] sm:$0xff]
    %v351 = vld [vmem:[#allocation5 + $0x928] sm:$0xff]
    %v352 = vld [vmem:[#allocation5 + $0x930] sm:$0xff]
    %v353 = vld [vmem:[#allocation5 + $0x938] sm:$0xff]
    %v354 = vld [vmem:[#allocation5 + $0x940] sm:$0xff]
    %v355 = vld [vmem:[#allocation5 + $0x948] sm:$0xff]
    %v356 = vld [vmem:[#allocation5 + $0x950] sm:$0xff]
    %v357 = vld [vmem:[#allocation5 + $0x958] sm:$0xff]
    %v358 = vld [vmem:[#allocation5 + $0x960] sm:$0xff]
    %v359 = vld [vmem:[#allocation5 + $0x968] sm:$0xff]
    %v360 = vld [vmem:[#allocation5 + $0x970] sm:$0xff]
    %v361 = vld [vmem:[#allocation5 + $0x978] sm:$0xff]
    %v362 = vld [vmem:[#allocation5 + $0x980] sm:$0xff]
    %v363 = vld [vmem:[#allocation5 + $0x988] sm:$0xff]
    %v364 = vld [vmem:[#allocation5 + $0x990] sm:$0xff]
    %v365 = vld [vmem:[#allocation5 + $0x998] sm:$0xff]
    %v366 = vld [vmem:[#allocation5 + $0x9a0] sm:$0xff]
    %v367 = vld [vmem:[#allocation5 + $0x9a8] sm:$0xff]
    %v368 = vld [vmem:[#allocation5 + $0x9b0] sm:$0xff]
    %v369 = vld [vmem:[#allocation5 + $0x9b8] sm:$0xff]
    %v370 = vld [vmem:[#allocation5 + $0x9c0] sm:$0xff]
    %v371 = vld [vmem:[#allocation5 + $0x9c8] sm:$0xff]
    %v372 = vld [vmem:[#allocation5 + $0x9d0] sm:$0xff]
    %v373 = vld [vmem:[#allocation5 + $0x9d8] sm:$0xff]
    %v374 = vld [vmem:[#allocation5 + $0x9e0] sm:$0xff]
    %v375 = vld [vmem:[#allocation5 + $0x9e8] sm:$0xff]
    %v376 = vld [vmem:[#allocation5 + $0x9f0] sm:$0xff]
    %v377 = vld [vmem:[#allocation5 + $0x9f8] sm:$0xff]
    %v378 = vld [vmem:[#allocation5 + $0xa00] sm:$0xff]
    %v379 = vld [vmem:[#allocation5 + $0xa08] sm:$0xff]
    %v380 = vld [vmem:[#allocation5 + $0xa10] sm:$0xff]
    %v381 = vld [vmem:[#allocation5 + $0xa18] sm:$0xff]
    %v382 = vld [vmem:[#allocation5 + $0xa20] sm:$0xff]
    %v383 = vld [vmem:[#allocation5 + $0xa28] sm:$0xff]
    %v384 = vld [vmem:[#allocation5 + $0xa30] sm:$0xff]
    %v385 = vld [vmem:[#allocation5 + $0xa38] sm:$0xff]
    %v386 = vld [vmem:[#allocation5 + $0xa40] sm:$0xff]
    %v387 = vld [vmem:[#allocation5 + $0xa48] sm:$0xff]
    %v388 = vld [vmem:[#allocation5 + $0xa50] sm:$0xff]
    %v389 = vld [vmem:[#allocation5 + $0xa58] sm:$0xff]
    %v390 = vld [vmem:[#allocation5 + $0xa60] sm:$0xff]
    %v391 = vld [vmem:[#allocation5 + $0xa68] sm:$0xff]
    %v392 = vld [vmem:[#allocation5 + $0xa70] sm:$0xff]
    %v393 = vld [vmem:[#allocation5 + $0xa78] sm:$0xff]
    %v394 = vld [vmem:[#allocation5 + $0xa80] sm:$0xff]
    %v395 = vld [vmem:[#allocation5 + $0xa88] sm:$0xff]
    %v396 = vld [vmem:[#allocation5 + $0xa90] sm:$0xff]
    %v397 = vld [vmem:[#allocation5 + $0xa98] sm:$0xff]
    %v398 = vld [vmem:[#allocation5 + $0xaa0] sm:$0xff]
    %v399 = vld [vmem:[#allocation5 + $0xaa8] sm:$0xff]
    %v400 = vld [vmem:[#allocation5 + $0xab0] sm:$0xff]
    %v401 = vld [vmem:[#allocation5 + $0xab8] sm:$0xff]
    %v402 = vld [vmem:[#allocation5 + $0xac0] sm:$0xff]
    %v403 = vld [vmem:[#allocation5 + $0xac8] sm:$0xff]
    %v404 = vld [vmem:[#allocation5 + $0xad0] sm:$0xff]
    %v405 = vld [vmem:[#allocation5 + $0xad8] sm:$0xff]
    %v406 = vld [vmem:[#allocation5 + $0xae0] sm:$0xff]
    %v407 = vld [vmem:[#allocation5 + $0xae8] sm:$0xff]
    %v408 = vld [vmem:[#allocation5 + $0xaf0] sm:$0xff]
    %v409 = vld [vmem:[#allocation5 + $0xaf8] sm:$0xff]
    %v410 = vld [vmem:[#allocation7] ss:$8 sm:$0x3]
    %s411 = scalar_lea.vmem [#allocation7], 1
    %v412 = vld [vmem:[%s411] ss:$8 sm:$0x3]
    %s413 = scalar_lea.vmem [#allocation7], 2
    %v414 = vld [vmem:[%s413] ss:$8 sm:$0x3]
    %v415 = vld [vmem:[#allocation7 + $0x3] ss:$0 sm:$0xff]
    %v416 = vld [vmem:[#allocation7 + $0x4] ss:$0 sm:$0xff]
    %v418 = vlaneseq
    %v419 = vshrl.u32 %v418, 7
    %v420 = vsub.s32 0, %v419
    %v421 = vrot.slane %v410, %v420
    %v422 = vlaneseq
    %v423 = vshrl.u32 %v422, 7
    %v424 = vsub.s32 1, %v423
    %v425 = vrot.slane %v410, %v424
    %v430 = vcombine.high %v54, %v54
    %v432 = vunpack.c.l.s4 1983009808
    %v433 = vunpack.c.0.s8 %v432
    %v434 = vlaneseq
    %v435 = vshrl.u32 %v434, 7
    %v436 = vsub.s32 %v433, %v435
    %v437 = vrot.slane %v54, %v436
    %v439 = vunpack.c.l.s4 1983009808
    %v440 = vunpack.c.0.s8 %v439
    %v441 = vlaneseq
    %v442 = vshrl.u32 %v441, 7
    %v443 = vsub.s32 %v440, %v442
    %v444 = vrot.slane %v430, %v443
    %v445 = vcombine.high %v437, %v437
    %v446 = vcombine.high %v444, %v444
    %v448 = vunpack.c.l.s4 1983009808
    %v449 = vunpack.c.0.s8 %v448
    %v450 = vlaneseq
    %v451 = vshrl.u32 %v450, 7
    %v452 = vsub.s32 %v449, %v451
    %v453 = vrot.slane %v55, %v452
    %459 = vmatprep.subr.mxu0 %v59
    %460 = vmatpush1.msra.mxu0 %v58
    %461 = vmatprep.subr.mxu0 %v61
    %462 = vmatpush1.msra.mxu0 %v60
    %463 = vmatprep.subr.mxu0 %v63
    %464 = vmatpush1.msra.mxu0 %v62
    %465 = vmatprep.subr.mxu0 %v65
    %466 = vmatpush1.msra.mxu0 %v64
    %467 = vmatprep.subr.mxu0 %v67
    %468 = vmatpush1.msra.mxu0 %v66
    %469 = vmatprep.subr.mxu0 %v69
    %470 = vmatpush1.msra.mxu0 %v68
    %471 = vmatprep.subr.mxu0 %v71
    %472 = vmatpush1.msra.mxu0 %v70
    %473 = vmatprep.subr.mxu0 %v73
    %474 = vmatpush1.msra.mxu0 %v72
    %475 = vmatprep.subr.mxu0 %v75
    %476 = vmatpush1.msra.mxu0 %v74
    %477 = vmatprep.subr.mxu0 %v77
    %478 = vmatpush1.msra.mxu0 %v76
    %479 = vmatprep.subr.mxu0 %v79
    %480 = vmatpush1.msra.mxu0 %v78
    %481 = vmatprep.subr.mxu0 %v81
    %482 = vmatpush1.msra.mxu0 %v80
    %483 = vmatprep.subr.mxu0 %v83
    %484 = vmatpush1.msra.mxu0 %v82
    %485 = vmatprep.subr.mxu0 %v85
    %486 = vmatpush1.msra.mxu0 %v84
    %487 = vmatprep.subr.mxu0 %v87
    %488 = vmatpush1.msra.mxu0 %v86
    %489 = vmatprep.subr.mxu0 %v89
    %490 = vmatpush1.msra.mxu0 %v88
    %491 = vmatprep.subr.mxu0 %v91
    %492 = vmatpush1.msra.mxu0 %v90
    %493 = vmatprep.subr.mxu0 %v93
    %494 = vmatpush1.msra.mxu0 %v92
    %495 = vmatprep.subr.mxu0 %v95
    %496 = vmatpush1.msra.mxu0 %v94
    %497 = vmatprep.subr.mxu0 %v97
    %498 = vmatpush1.msra.mxu0 %v96
    %499 = vmatprep.subr.mxu0 %v99
    %500 = vmatpush1.msra.mxu0 %v98
    %501 = vmatprep.subr.mxu0 %v101
    %502 = vmatpush1.msra.mxu0 %v100
    %503 = vmatprep.subr.mxu0 %v103
    %504 = vmatpush1.msra.mxu0 %v102
    %505 = vmatprep.subr.mxu0 %v105
    %506 = vmatpush1.msra.mxu0 %v104
    %507 = vmatprep.subr.mxu0 %v107
    %508 = vmatpush1.msra.mxu0 %v106
    %509 = vmatprep.subr.mxu0 %v109
    %510 = vmatpush1.msra.mxu0 %v108
    %511 = vmatprep.subr.mxu0 %v111
    %512 = vmatpush1.msra.mxu0 %v110
    %513 = vmatprep.subr.mxu0 %v113
    %514 = vmatpush1.msra.mxu0 %v112
    %515 = vmatprep.subr.mxu0 %v115
    %516 = vmatpush1.msra.mxu0 %v114
    %517 = vmatprep.subr.mxu0 %v117
    %518 = vmatpush1.msra.mxu0 %v116
    %519 = vmatprep.subr.mxu0 %v119
    %520 = vmatpush1.msra.mxu0 %v118
    %521 = vmatprep.subr.mxu0 %v121
    %522 = vmatpush1.msra.mxu0 %v120
    %523 = vmatprep.mubr.f32.mxu0 %v445
    %524 = vmatmul.mubr.f32.gmra.mrb[0].mxu0 %v437
    %v525 = vpop.f32.mrb[0].mxu0
    %v526 = vadd.f32 %v421, %v525
    %v527 = vpop.f32.mrb[0].mxu0
    %v528 = vadd.f32 %v425, %v527
    %529 = vdwg.mxu0
    %530 = vmatprep.subr.mxu0 %v123
    %531 = vmatpush1.msra.mxu0 %v122
    %532 = vmatprep.subr.mxu0 %v125
    %533 = vmatpush1.msra.mxu0 %v124
    %534 = vmatprep.subr.mxu0 %v127
    %535 = vmatpush1.msra.mxu0 %v126
    %536 = vmatprep.subr.mxu0 %v129
    %537 = vmatpush1.msra.mxu0 %v128
    %538 = vmatprep.subr.mxu0 %v131
    %539 = vmatpush1.msra.mxu0 %v130
    %540 = vmatprep.subr.mxu0 %v133
    %541 = vmatpush1.msra.mxu0 %v132
    %542 = vmatprep.subr.mxu0 %v135
    %543 = vmatpush1.msra.mxu0 %v134
    %544 = vmatprep.subr.mxu0 %v137
    %545 = vmatpush1.msra.mxu0 %v136
    %546 = vmatprep.subr.mxu0 %v139
    %547 = vmatpush1.msra.mxu0 %v138
    %548 = vmatprep.subr.mxu0 %v141
    %549 = vmatpush1.msra.mxu0 %v140
    %550 = vmatprep.subr.mxu0 %v143
    %551 = vmatpush1.msra.mxu0 %v142
    %552 = vmatprep.subr.mxu0 %v145
    %553 = vmatpush1.msra.mxu0 %v144
    %554 = vmatprep.subr.mxu0 %v147
    %555 = vmatpush1.msra.mxu0 %v146
    %556 = vmatprep.subr.mxu0 %v149
    %557 = vmatpush1.msra.mxu0 %v148
    %558 = vmatprep.subr.mxu0 %v151
    %559 = vmatpush1.msra.mxu0 %v150
    %560 = vmatprep.subr.mxu0 %v153
    %561 = vmatpush1.msra.mxu0 %v152
    %562 = vmatprep.subr.mxu0 %v155
    %563 = vmatpush1.msra.mxu0 %v154
    %564 = vmatprep.subr.mxu0 %v157
    %565 = vmatpush1.msra.mxu0 %v156
    %566 = vmatprep.subr.mxu0 %v159
    %567 = vmatpush1.msra.mxu0 %v158
    %568 = vmatprep.subr.mxu0 %v161
    %569 = vmatpush1.msra.mxu0 %v160
    %570 = vmatprep.subr.mxu0 %v163
    %571 = vmatpush1.msra.mxu0 %v162
    %572 = vmatprep.subr.mxu0 %v165
    %573 = vmatpush1.msra.mxu0 %v164
    %574 = vmatprep.subr.mxu0 %v167
    %575 = vmatpush1.msra.mxu0 %v166
    %576 = vmatprep.subr.mxu0 %v169
    %577 = vmatpush1.msra.mxu0 %v168
    %578 = vmatprep.subr.mxu0 %v171
    %579 = vmatpush1.msra.mxu0 %v170
    %580 = vmatprep.subr.mxu0 %v173
    %581 = vmatpush1.msra.mxu0 %v172
    %582 = vmatprep.subr.mxu0 %v175
    %583 = vmatpush1.msra.mxu0 %v174
    %584 = vmatprep.subr.mxu0 %v177
    %585 = vmatpush1.msra.mxu0 %v176
    %586 = vmatprep.subr.mxu0 %v179
    %587 = vmatpush1.msra.mxu0 %v178
    %588 = vmatprep.subr.mxu0 %v181
    %589 = vmatpush1.msra.mxu0 %v180
    %590 = vmatprep.subr.mxu0 %v183
    %591 = vmatpush1.msra.mxu0 %v182
    %592 = vmatprep.subr.mxu0 %v185
    %593 = vmatpush1.msra.mxu0 %v184
    %594 = vmatprep.mubr.f32.mxu0 %v446
    %595 = vmatmul.mubr.f32.gmra.mrb[0].mxu0 %v444
    %v596 = vpop.f32.mrb[0].mxu0
    %v597 = vadd.f32 %v526, %v596
    %v598 = vpop.f32.mrb[0].mxu0
    %v599 = vadd.f32 %v528, %v598
    %600 = vdwg.mxu0
    %601 = vmatprep.subr.mxu0 %v187
    %602 = vmatpush1.msra.mxu0 %v186
    %603 = vmatprep.subr.mxu0 %v189
    %604 = vmatpush1.msra.mxu0 %v188
    %605 = vmatprep.subr.mxu0 %v191
    %606 = vmatpush1.msra.mxu0 %v190
    %607 = vmatprep.subr.mxu0 %v193
    %608 = vmatpush1.msra.mxu0 %v192
    %609 = vmatprep.subr.mxu0 %v195
    %610 = vmatpush1.msra.mxu0 %v194
    %611 = vmatprep.subr.mxu0 %v197
    %612 = vmatpush1.msra.mxu0 %v196
    %613 = vmatprep.subr.mxu0 %v199
    %614 = vmatpush1.msra.mxu0 %v198
    %615 = vmatprep.subr.mxu0 %v201
    %616 = vmatpush1.msra.mxu0 %v200
    %617 = vmatprep.subr.mxu0 %v203
    %618 = vmatpush1.msra.mxu0 %v202
    %619 = vmatprep.subr.mxu0 %v205
    %620 = vmatpush1.msra.mxu0 %v204
    %621 = vmatprep.subr.mxu0 %v207
    %622 = vmatpush1.msra.mxu0 %v206
    %623 = vmatprep.subr.mxu0 %v209
    %624 = vmatpush1.msra.mxu0 %v208
    %625 = vmatprep.subr.mxu0 %v211
    %626 = vmatpush1.msra.mxu0 %v210
    %627 = vmatprep.subr.mxu0 %v213
    %628 = vmatpush1.msra.mxu0 %v212
    %629 = vmatprep.subr.mxu0 %v215
    %630 = vmatpush1.msra.mxu0 %v214
    %631 = vmatprep.subr.mxu0 %v217
    %632 = vmatpush1.msra.mxu0 %v216
    %633 = vmatprep.subr.mxu0 0.0
    %634 = vmatpush1.msra.mxu0 0.0
    %635 = vmatprep.subr.mxu0 0.0
    %636 = vmatpush1.msra.mxu0 0.0
    %637 = vmatprep.subr.mxu0 0.0
    %638 = vmatpush1.msra.mxu0 0.0
    %639 = vmatprep.subr.mxu0 0.0
    %640 = vmatpush1.msra.mxu0 0.0
    %641 = vmatprep.subr.mxu0 0.0
    %642 = vmatpush1.msra.mxu0 0.0
    %643 = vmatprep.subr.mxu0 0.0
    %644 = vmatpush1.msra.mxu0 0.0
    %645 = vmatprep.subr.mxu0 0.0
    %646 = vmatpush1.msra.mxu0 0.0
    %647 = vmatprep.subr.mxu0 0.0
    %648 = vmatpush1.msra.mxu0 0.0
    %649 = vmatprep.subr.mxu0 0.0
    %650 = vmatpush1.msra.mxu0 0.0
    %651 = vmatprep.subr.mxu0 0.0
    %652 = vmatpush1.msra.mxu0 0.0
    %653 = vmatprep.subr.mxu0 0.0
    %654 = vmatpush1.msra.mxu0 0.0
    %655 = vmatprep.subr.mxu0 0.0
    %656 = vmatpush1.msra.mxu0 0.0
    %657 = vmatprep.subr.mxu0 0.0
    %658 = vmatpush1.msra.mxu0 0.0
    %659 = vmatprep.subr.mxu0 0.0
    %660 = vmatpush1.msra.mxu0 0.0
    %661 = vmatprep.subr.mxu0 0.0
    %662 = vmatpush1.msra.mxu0 0.0
    %663 = vmatprep.subr.mxu0 0.0
    %664 = vmatpush1.msra.mxu0 0.0
    %665 = vmatprep.mubr.f32.mxu0 0.0
    %666 = vmatmul.mubr.f32.gmra.mrb[0].mxu0 %v453
    %v667 = vpop.f32.mrb[0].mxu0
    %v668 = vadd.f32 %v597, %v667
    %v669 = vpop.f32.mrb[0].mxu0
    %v670 = vadd.f32 %v599, %v669
    %671 = vdwg.mxu0
    %v672 = vtanh.pop %v668
    %v673 = vtanh.pop %v670
    %v674 = vmax.f32 %v672, 0.0
    %v675 = vmax.f32 %v673, 0.0
    %v678 = vunpack.c.l.s4 1983009808
    %v679 = vunpack.c.0.s8 %v678
    %v680 = vlaneseq
    %v681 = vshrl.u32 %v680, 7
    %v682 = vsub.s32 %v679, %v681
    %v683 = vrot.slane %v56, %v682
    %v684 = vcombine.high %v683, %v683
    %v688 = vlaneseq
    %v689 = vshrl.u32 %v688, 7
    %v690 = vsub.s32 0, %v689
    %v691 = vrot.slane %v412, %v690
    %v692 = vlaneseq
    %v693 = vshrl.u32 %v692, 7
    %v694 = vsub.s32 1, %v693
    %v695 = vrot.slane %v412, %v694
    %698 = vmatprep.subr.mxu0 %v219
    %699 = vmatpush1.msra.mxu0 %v218
    %700 = vmatprep.subr.mxu0 %v221
    %701 = vmatpush1.msra.mxu0 %v220
    %702 = vmatprep.subr.mxu0 %v223
    %703 = vmatpush1.msra.mxu0 %v222
    %704 = vmatprep.subr.mxu0 %v225
    %705 = vmatpush1.msra.mxu0 %v224
    %706 = vmatprep.subr.mxu0 %v227
    %707 = vmatpush1.msra.mxu0 %v226
    %708 = vmatprep.subr.mxu0 %v229
    %709 = vmatpush1.msra.mxu0 %v228
    %710 = vmatprep.subr.mxu0 %v231
    %711 = vmatpush1.msra.mxu0 %v230
    %712 = vmatprep.subr.mxu0 %v233
    %713 = vmatpush1.msra.mxu0 %v232
    %714 = vmatprep.subr.mxu0 %v235
    %715 = vmatpush1.msra.mxu0 %v234
    %716 = vmatprep.subr.mxu0 %v237
    %717 = vmatpush1.msra.mxu0 %v236
    %718 = vmatprep.subr.mxu0 %v239
    %719 = vmatpush1.msra.mxu0 %v238
    %720 = vmatprep.subr.mxu0 %v241
    %721 = vmatpush1.msra.mxu0 %v240
    %722 = vmatprep.subr.mxu0 %v243
    %723 = vmatpush1.msra.mxu0 %v242
    %724 = vmatprep.subr.mxu0 %v245
    %725 = vmatpush1.msra.mxu0 %v244
    %726 = vmatprep.subr.mxu0 %v247
    %727 = vmatpush1.msra.mxu0 %v246
    %728 = vmatprep.subr.mxu0 %v249
    %729 = vmatpush1.msra.mxu0 %v248
    %730 = vmatprep.subr.mxu0 %v251
    %731 = vmatpush1.msra.mxu0 %v250
    %732 = vmatprep.subr.mxu0 %v253
    %733 = vmatpush1.msra.mxu0 %v252
    %734 = vmatprep.subr.mxu0 %v255
    %735 = vmatpush1.msra.mxu0 %v254
    %736 = vmatprep.subr.mxu0 %v257
    %737 = vmatpush1.msra.mxu0 %v256
    %738 = vmatprep.subr.mxu0 %v259
    %739 = vmatpush1.msra.mxu0 %v258
    %740 = vmatprep.subr.mxu0 %v261
    %741 = vmatpush1.msra.mxu0 %v260
    %742 = vmatprep.subr.mxu0 %v263
    %743 = vmatpush1.msra.mxu0 %v262
    %744 = vmatprep.subr.mxu0 %v265
    %745 = vmatpush1.msra.mxu0 %v264
    %746 = vmatprep.subr.mxu0 %v267
    %747 = vmatpush1.msra.mxu0 %v266
    %748 = vmatprep.subr.mxu0 %v269
    %749 = vmatpush1.msra.mxu0 %v268
    %750 = vmatprep.subr.mxu0 %v271
    %751 = vmatpush1.msra.mxu0 %v270
    %752 = vmatprep.subr.mxu0 %v273
    %753 = vmatpush1.msra.mxu0 %v272
    %754 = vmatprep.subr.mxu0 %v275
    %755 = vmatpush1.msra.mxu0 %v274
    %756 = vmatprep.subr.mxu0 %v277
    %757 = vmatpush1.msra.mxu0 %v276
    %758 = vmatprep.subr.mxu0 %v279
    %759 = vmatpush1.msra.mxu0 %v278
    %760 = vmatprep.subr.mxu0 %v281
    %761 = vmatpush1.msra.mxu0 %v280
    %762 = vmatprep.mubr.f32.mxu0 %v675
    %763 = vmatmul.mubr.f32.gmra.mrb[0].mxu0 %v674
    %v764 = vpop.f32.mrb[0].mxu0
    %v765 = vadd.f32 %v691, %v764
    %v766 = vpop.f32.mrb[0].mxu0
    %v767 = vadd.f32 %v695, %v766
    %768 = vdwg.mxu0
    %769 = vmatprep.subr.mxu0 %v283
    %770 = vmatpush1.msra.mxu0 %v282
    %771 = vmatprep.subr.mxu0 %v285
    %772 = vmatpush1.msra.mxu0 %v284
    %773 = vmatprep.subr.mxu0 %v287
    %774 = vmatpush1.msra.mxu0 %v286
    %775 = vmatprep.subr.mxu0 %v289
    %776 = vmatpush1.msra.mxu0 %v288
    %777 = vmatprep.subr.mxu0 %v291
    %778 = vmatpush1.msra.mxu0 %v290
    %779 = vmatprep.subr.mxu0 %v293
    %780 = vmatpush1.msra.mxu0 %v292
    %781 = vmatprep.subr.mxu0 %v295
    %782 = vmatpush1.msra.mxu0 %v294
    %783 = vmatprep.subr.mxu0 %v297
    %784 = vmatpush1.msra.mxu0 %v296
    %785 = vmatprep.subr.mxu0 %v299
    %786 = vmatpush1.msra.mxu0 %v298
    %787 = vmatprep.subr.mxu0 %v301
    %788 = vmatpush1.msra.mxu0 %v300
    %789 = vmatprep.subr.mxu0 %v303
    %790 = vmatpush1.msra.mxu0 %v302
    %791 = vmatprep.subr.mxu0 %v305
    %792 = vmatpush1.msra.mxu0 %v304
    %793 = vmatprep.subr.mxu0 %v307
    %794 = vmatpush1.msra.mxu0 %v306
    %795 = vmatprep.subr.mxu0 %v309
    %796 = vmatpush1.msra.mxu0 %v308
    %797 = vmatprep.subr.mxu0 %v311
    %798 = vmatpush1.msra.mxu0 %v310
    %799 = vmatprep.subr.mxu0 %v313
    %800 = vmatpush1.msra.mxu0 %v312
    %801 = vmatprep.subr.mxu0 %v315
    %802 = vmatpush1.msra.mxu0 %v314
    %803 = vmatprep.subr.mxu0 %v317
    %804 = vmatpush1.msra.mxu0 %v316
    %805 = vmatprep.subr.mxu0 %v319
    %806 = vmatpush1.msra.mxu0 %v318
    %807 = vmatprep.subr.mxu0 %v321
    %808 = vmatpush1.msra.mxu0 %v320
    %809 = vmatprep.subr.mxu0 %v323
    %810 = vmatpush1.msra.mxu0 %v322
    %811 = vmatprep.subr.mxu0 %v325
    %812 = vmatpush1.msra.mxu0 %v324
    %813 = vmatprep.subr.mxu0 %v327
    %814 = vmatpush1.msra.mxu0 %v326
    %815 = vmatprep.subr.mxu0 %v329
    %816 = vmatpush1.msra.mxu0 %v328
    %817 = vmatprep.subr.mxu0 %v331
    %818 = vmatpush1.msra.mxu0 %v330
    %819 = vmatprep.subr.mxu0 %v333
    %820 = vmatpush1.msra.mxu0 %v332
    %821 = vmatprep.subr.mxu0 %v335
    %822 = vmatpush1.msra.mxu0 %v334
    %823 = vmatprep.subr.mxu0 %v337
    %824 = vmatpush1.msra.mxu0 %v336
    %825 = vmatprep.subr.mxu0 %v339
    %826 = vmatpush1.msra.mxu0 %v338
    %827 = vmatprep.subr.mxu0 %v341
    %828 = vmatpush1.msra.mxu0 %v340
    %829 = vmatprep.subr.mxu0 %v343
    %830 = vmatpush1.msra.mxu0 %v342
    %831 = vmatprep.subr.mxu0 %v345
    %832 = vmatpush1.msra.mxu0 %v344
    %833 = vmatprep.mubr.f32.mxu0 %v684
    %834 = vmatmul.mubr.f32.gmra.mrb[0].mxu0 %v683
    %v835 = vpop.f32.mrb[0].mxu0
    %v836 = vadd.f32 %v765, %v835
    %v837 = vpop.f32.mrb[0].mxu0
    %v838 = vadd.f32 %v767, %v837
    %839 = vdwg.mxu0
    %v840 = vtanh.pop %v836
    %v841 = vtanh.pop %v838
    %v842 = vmax.f32 %v840, 0.0
    %v843 = vmax.f32 %v841, 0.0
    %v845 = vlaneseq
    %v846 = vshrl.u32 %v845, 7
    %v847 = vsub.s32 0, %v846
    %v848 = vrot.slane %v414, %v847
    %850 = vmatprep.subr.mxu0 %v347
    %851 = vmatpush1.msra.mxu0 %v346
    %852 = vmatprep.subr.mxu0 %v349
    %853 = vmatpush1.msra.mxu0 %v348
    %854 = vmatprep.subr.mxu0 %v351
    %855 = vmatpush1.msra.mxu0 %v350
    %856 = vmatprep.subr.mxu0 %v353
    %857 = vmatpush1.msra.mxu0 %v352
    %858 = vmatprep.subr.mxu0 %v355
    %859 = vmatpush1.msra.mxu0 %v354
    %860 = vmatprep.subr.mxu0 %v357
    %861 = vmatpush1.msra.mxu0 %v356
    %862 = vmatprep.subr.mxu0 %v359
    %863 = vmatpush1.msra.mxu0 %v358
    %864 = vmatprep.subr.mxu0 %v361
    %865 = vmatpush1.msra.mxu0 %v360
    %866 = vmatprep.subr.mxu0 %v363
    %867 = vmatpush1.msra.mxu0 %v362
    %868 = vmatprep.subr.mxu0 %v365
    %869 = vmatpush1.msra.mxu0 %v364
    %870 = vmatprep.subr.mxu0 %v367
    %871 = vmatpush1.msra.mxu0 %v366
    %872 = vmatprep.subr.mxu0 %v369
    %873 = vmatpush1.msra.mxu0 %v368
    %874 = vmatprep.subr.mxu0 %v371
    %875 = vmatpush1.msra.mxu0 %v370
    %876 = vmatprep.subr.mxu0 %v373
    %877 = vmatpush1.msra.mxu0 %v372
    %878 = vmatprep.subr.mxu0 %v375
    %879 = vmatpush1.msra.mxu0 %v374
    %880 = vmatprep.subr.mxu0 %v377
    %881 = vmatpush1.msra.mxu0 %v376
    %882 = vmatprep.subr.mxu0 %v379
    %883 = vmatpush1.msra.mxu0 %v378
    %884 = vmatprep.subr.mxu0 %v381
    %885 = vmatpush1.msra.mxu0 %v380
    %886 = vmatprep.subr.mxu0 %v383
    %887 = vmatpush1.msra.mxu0 %v382
    %888 = vmatprep.subr.mxu0 %v385
    %889 = vmatpush1.msra.mxu0 %v384
    %890 = vmatprep.subr.mxu0 %v387
    %891 = vmatpush1.msra.mxu0 %v386
    %892 = vmatprep.subr.mxu0 %v389
    %893 = vmatpush1.msra.mxu0 %v388
    %894 = vmatprep.subr.mxu0 %v391
    %895 = vmatpush1.msra.mxu0 %v390
    %896 = vmatprep.subr.mxu0 %v393
    %897 = vmatpush1.msra.mxu0 %v392
    %898 = vmatprep.subr.mxu0 %v395
    %899 = vmatpush1.msra.mxu0 %v394
    %900 = vmatprep.subr.mxu0 %v397
    %901 = vmatpush1.msra.mxu0 %v396
    %902 = vmatprep.subr.mxu0 %v399
    %903 = vmatpush1.msra.mxu0 %v398
    %904 = vmatprep.subr.mxu0 %v401
    %905 = vmatpush1.msra.mxu0 %v400
    %906 = vmatprep.subr.mxu0 %v403
    %907 = vmatpush1.msra.mxu0 %v402
    %908 = vmatprep.subr.mxu0 %v405
    %909 = vmatpush1.msra.mxu0 %v404
    %910 = vmatprep.subr.mxu0 %v407
    %911 = vmatpush1.msra.mxu0 %v406
    %912 = vmatprep.subr.mxu0 %v409
    %913 = vmatpush1.msra.mxu0 %v408
    %914 = vmatprep.mubr.f32.mxu0 %v843
    %915 = vmatmul.mubr.f32.gmra.mrb[0].mxu0 %v842
    %v916 = vpop.f32.mrb[0].mxu0
    %v917 = vadd.f32 %v848, %v916
    %v918 = vpop.f32.mrb[0].mxu0
    %919 = vdwg.mxu0
    %v920 = vtanh.pop %v917
    %921 = vst [vmem:[#allocation8] sm:$0x3] %v920
    %v922 = vsub.f32 %v57, %v920
    %v923 = vmul.f32 %v922, %v922
    %v924 = vsub.f32 0.0, %v923
    %v925 = vmul.f32 %v924, %v415
    %v926 = vadd.f32 %v925, %v416
    %vm927 = vcmask 1041408
    %v928 = vsel %vm927, %v926, 0.0
    %929 = vadd.xlane.f32.xlu0 %v928
    %v930 = vpop.xlane.xlu0 %929
    %vm931 = vcmask 1024
    %932 = vst.msk [vmem:[%s4] sm:$0x3] %vm931, %v930
    // Predicated region
    $region26: #{tpu_custom_call.1} parent=1 // pred_check
      _
    $region27: #{tpu_custom_call.1} parent=1 // pred_check_branch
      %934 = sbr.rel (0) target = $region29
    $region28: #{tpu_custom_call.1} parent=1 // pred_region
      %s936 = ssub.s32 32, 32
      %937 = vsyncadd [#allocation4], %s936
      %s939 = sshll.u32 [#allocation8], 4
      %s940 = int_to_ptr.vmem [resolvable:$true] %s939
      %942 = dma.vmem_to_hbm [thread:$0]  %s940, 32, %s3, [#allocation4]
    $region29: #{tpu_custom_call.1} parent=1 // pred_fallthru
      _
    // Predicated region
    $region30: #{tpu_custom_call.1} parent=1 // pred_check
      _
    $region31: #{tpu_custom_call.1} parent=1 // pred_check_branch
      %944 = sbr.rel (0) target = $region33
    $region32: #{tpu_custom_call.1} parent=1 // pred_region
      _
    $region33: #{tpu_custom_call.1} parent=1 // pred_fallthru
      _
    // Predicated region
    $region34: #{tpu_custom_call.1} parent=1 // pred_check
      _
    $region35: #{tpu_custom_call.1} parent=1 // pred_check_branch
      %946 = sbr.rel (0) target = $region37
    $region36: #{tpu_custom_call.1} parent=1 // pred_region
      %947 = dma.done [#allocation4], 32
    $region37: #{tpu_custom_call.1} parent=1 // pred_fallthru
      _
    // Predicated region
    $region38: #{tpu_custom_call.1} parent=1 // pred_check
      _
    $region39: #{tpu_custom_call.1} parent=1 // pred_check_branch
      %949 = sbr.rel (0) target = $region41
    $region40: #{tpu_custom_call.1} parent=1 // pred_region
      _
    $region41: #{tpu_custom_call.1} parent=1 // pred_fallthru
      _
    %950 = vsyncpa [#allocation3], 1
    %951 = vsyncpa [#allocation6], 1
    %952 = vsyncpa [#allocation4], 1

</llo_original>
